<compile_context>
chip_gen: v5e
topology: v5e:2x2
jax: 0.10.0
libtpu: 0.0.40
codegen_flags: <defaults>
</compile_context>

<pallas_src>
import jax
import jax.numpy as jnp
import numpy as np
from jax.experimental import pallas as pl
from jax.experimental.pallas import tpu as pltpu

_LANE = 128


def _rup(n, m):
    return ((n + m - 1) // m) * m


# ---------------------------------------------------------------------------
# Fused kernel: 4 lane-aligned GEMMs, all activations live in VMEM / vregs.
# Weights may be f32 or bf16 (activations are cast to the weight dtype before
# each dot); accumulation and all elementwise ops (bias, ReLU, tanh) stay f32.
# ---------------------------------------------------------------------------
def _fused_autoencoder_kernel(x_ref, w1, b1, w2, b2, wm, bm, w4, b4, o_ref):
    f32 = jnp.float32

    def dense(h, w_ref, b_ref):
        return jnp.dot(h.astype(w_ref.dtype), w_ref[...],
                       preferred_element_type=f32) + b_ref[...]

    h = jnp.maximum(dense(x_ref[...], w1, b1), 0.0)    # cov1 + ReLU
    h = jnp.maximum(dense(h, w2, b2), 0.0)             # cov2 + ReLU
    h = jnp.maximum(dense(h, wm, bm), 0.0)             # cov3∘lin1∘b_lin1∘b_cov3∘b_cov2 + ReLU
    o_ref[...] = jnp.tanh(dense(h, w4, b4)).astype(o_ref.dtype)   # b_cov1 + tanh


def _pick_tm(n_rows):
    # Small batches: a single grid step (per-step overhead ~0.35us would
    # otherwise dominate this cheap kernel).
    if n_rows <= 256:
        return _rup(max(n_rows, 8), 8)
    # Large batches: keep >= 2 grid steps ("parallel" axis shards across the
    # two v7x TensorCores), cap tile at 512 rows (v5e scoped-VMEM headroom).
    return min(512, _rup(pl.cdiv(n_rows, 2), 8))


def autoencoder_forward(x, packed, *, tm=None):
    """x: (N, 1, 8, 8) float32.  packed: output of prepare_params (GEMM-ready)."""
    N = x.shape[0]
    x_flat = x.reshape(N, -1).astype(jnp.float32)        # (N, 64) NCHW flatten
    d_in = x_flat.shape[1]
    d_out = packed[-2].shape[1]                           # 64

    if tm is None:
        tm = _pick_tm(N)
    m_pad = _rup(N, tm)
    if m_pad != N:                                        # pad batch rows only
        x_flat = jnp.pad(x_flat, ((0, m_pad - N), (0, 0)))

    in_specs = [pl.BlockSpec((tm, d_in), lambda i: (i, 0))]
    # Weights/biases: constant block index -> fetched once, VMEM-resident.
    in_specs += [pl.BlockSpec(p.shape, lambda i: (0, 0)) for p in packed]

    flops = 2 * m_pad * sum(int(packed[j].shape[0]) * int(packed[j].shape[1])
                            for j in range(0, 8, 2))
    bytes_accessed = 4 * (m_pad * d_in + m_pad * d_out) + sum(
        int(p.size) * p.dtype.itemsize for p in packed)
    cost = pl.CostEstimate(flops=int(flops),
                           transcendentals=int(m_pad * d_out),
                           bytes_accessed=int(bytes_accessed))

    out = pl.pallas_call(
        _fused_autoencoder_kernel,
        out_shape=jax.ShapeDtypeStruct((m_pad, d_out), jnp.float32),
        grid=(m_pad // tm,),
        in_specs=in_specs,
        out_specs=pl.BlockSpec((tm, d_out), lambda i: (i, 0)),
        compiler_params=pltpu.CompilerParams(dimension_semantics=("parallel",)),
        cost_estimate=cost,
    )(x_flat, *packed)

    return out[:N].reshape(N, 1, 8, 8)


# ---------------------------------------------------------------------------
# One-time parameter packing (OFF the forward hot path).
# Each conv / transposed conv becomes its exact dense operator on the
# per-sample flattened activation; the affine chain cov3..b_cov2 is composed
# into a single matrix+bias; everything is zero-padded to MXU-friendly shapes.
# ---------------------------------------------------------------------------
def _conv2d_as_matrix(w, stride, pad, in_shape):
    """Dense M with flatten(conv(x)) = flatten(x) @ M (per sample, NCHW order)."""
    c_in, h, wd = in_shape
    d = c_in * h * wd
    eye = jnp.eye(d, dtype=jnp.float32).reshape(d, c_in, h, wd)
    out = jax.lax.conv_general_dilated(
        eye, w.astype(jnp.float32), (stride, stride), [(pad, pad), (pad, pad)],
        dimension_numbers=("NCHW", "OIHW", "NCHW"))
    return out.reshape(d, -1)


def _convT2d_as_matrix(w, stride, pad, out_pad, in_shape):
    """Dense M for nn.ConvTranspose2d (dilate + flip + channel-swap lowering)."""
    c_in, h, wd = in_shape
    k = w.shape[2]
    w_conv = jnp.flip(w.astype(jnp.float32), (2, 3)).transpose(1, 0, 2, 3)
    d = c_in * h * wd
    eye = jnp.eye(d, dtype=jnp.float32).reshape(d, c_in, h, wd)
    out = jax.lax.conv_general_dilated(
        eye, w_conv, (1, 1), [(k - 1 - pad, k - 1 - pad + out_pad)] * 2,
        lhs_dilation=(stride, stride),
        dimension_numbers=("NCHW", "OIHW", "NCHW"))
    return out.reshape(d, -1)


def prepare_params(P, dtype=jnp.float32):
    """PyTorch-layout params -> (w1, b1, w2, b2, wm, bm, w4, b4), GEMM-ready.

    `dtype` controls the dot-operand precision of the packed matrices
    (jnp.bfloat16 for the v6e/v7x MXU fast path); biases stay f32 so the
    elementwise path is native on every generation (incl. v5e).
    """
    f32 = jnp.float32

    def conv_bias(b, spatial):   # channel-major flatten: bias repeats per pixel
        return jnp.repeat(b.astype(f32), spatial)

    def pad_to(m, rows, cols):
        return jnp.zeros((rows, cols), f32).at[:m.shape[0], :m.shape[1]].set(m)

    # --- per-layer dense operators on flattened activations (unpadded) ---
    W1 = _conv2d_as_matrix(P["cov1_w"], 2, 1, (1, 8, 8))            # (64, 256)
    B1 = conv_bias(P["cov1_b"], 16)                                  # (256,)
    W2 = _conv2d_as_matrix(P["cov2_w"], 1, 1, (16, 4, 4))           # (256, 80)
    B2 = conv_bias(P["cov2_b"], 16)                                  # (80,)

    # Affine chain with no nonlinearity: cov3 -> lin1 -> b_lin1 -> b_cov3 -> b_cov2.
    chain = [
        (_conv2d_as_matrix(P["cov3_w"], 1, 1, (5, 4, 4)),  conv_bias(P["cov3_b"], 16)),
        (P["lin1_w"].T.astype(f32),                        P["lin1_b"].astype(f32)),
        (P["b_lin1_w"].T.astype(f32),                      P["b_lin1_b"].astype(f32)),
        (_convT2d_as_matrix(P["b_cov3_w"], 1, 1, 0, (2, 4, 4)), conv_bias(P["b_cov3_b"], 16)),
        (_convT2d_as_matrix(P["b_cov2_w"], 2, 1, 1, (5, 4, 4)), conv_bias(P["b_cov2_b"], 64)),
    ]
    Wm, Bm = chain[0]
    for Wn, Bn in chain[1:]:                                         # exact affine composition
        Bm = Bm @ Wn + Bn
        Wm = Wm @ Wn
    # Wm: (80, 1024), Bm: (1024,)

    W4 = _convT2d_as_matrix(P["b_cov1_w"], 1, 1, 0, (16, 8, 8))      # (1024, 64)
    B4 = conv_bias(P["b_cov1_b"], 64)                                # (64,)

    packed = (
        W1.astype(dtype),                     pad_to(B1[None, :], 1, 256),
        pad_to(W2, 256, _LANE).astype(dtype), pad_to(B2[None, :], 1, _LANE),
        pad_to(Wm, _LANE, 1024).astype(dtype), pad_to(Bm[None, :], 1, 1024),
        W4.astype(dtype),                     pad_to(B4[None, :], 1, 64),
    )
    return packed


# ---------------------------------------------------------------------------
# Pure-JAX (XLA conv) reference for verification
# ---------------------------------------------------------------------------
def _ref_conv2d(x, w, b, s, p):
    out = jax.lax.conv_general_dilated(
        x, w, (s, s), [(p, p), (p, p)],
        dimension_numbers=("NCHW", "OIHW", "NCHW"))
    return out + b.reshape(1, -1, 1, 1)


def _ref_convT2d(x, w, b, s, p, op):
    k = w.shape[2]
    w_conv = jnp.flip(w, (2, 3)).transpose(1, 0, 2, 3)
    out = jax.lax.conv_general_dilated(
        x, w_conv, (1, 1), [(k - 1 - p, k - 1 - p + op)] * 2,
        lhs_dilation=(s, s), dimension_numbers=("NCHW", "OIHW", "NCHW"))
    return out + b.reshape(1, -1, 1, 1)


def reference_forward(x, P):
    h = jax.nn.relu(_ref_conv2d(x, P["cov1_w"], P["cov1_b"], 2, 1))
    h = jax.nn.relu(_ref_conv2d(h, P["cov2_w"], P["cov2_b"], 1, 1))
    h = _ref_conv2d(h, P["cov3_w"], P["cov3_b"], 1, 1)
    h = h.reshape(-1, 32)
    z = h @ P["lin1_w"].T + P["lin1_b"]
    d = z @ P["b_lin1_w"].T + P["b_lin1_b"]
    d = d.reshape(-1, 2, 4, 4)
    d = _ref_convT2d(d, P["b_cov3_w"], P["b_cov3_b"], 1, 1, 0)
    d = jax.nn.relu(_ref_convT2d(d, P["b_cov2_w"], P["b_cov2_b"], 2, 1, 1))
    d = jnp.tanh(_ref_convT2d(d, P["b_cov1_w"], P["b_cov1_b"], 1, 1, 0))
    return d


# ---------------------------------------------------------------------------
# Deterministic parameter init (PyTorch-style uniform(-1/sqrt(fan_in), +...))
# ---------------------------------------------------------------------------
def _uniform(key, shape, fan_in):
    bound = 1.0 / np.sqrt(fan_in)
    return jax.random.uniform(key, shape, jnp.float32, -bound, bound)


def init_params(key):
    ks = jax.random.split(key, 16)
    P = {}
    # Conv2d weights: (Cout, Cin, k, k)
    P["cov1_w"] = _uniform(ks[0], (16, 1, 3, 3), 1 * 9)
    P["cov1_b"] = _uniform(ks[1], (16,), 1 * 9)
    P["cov2_w"] = _uniform(ks[2], (5, 16, 3, 3), 16 * 9)
    P["cov2_b"] = _uniform(ks[3], (5,), 16 * 9)
    P["cov3_w"] = _uniform(ks[4], (2, 5, 3, 3), 5 * 9)
    P["cov3_b"] = _uniform(ks[5], (2,), 5 * 9)
    # Linear weights: (out, in)
    P["lin1_w"] = _uniform(ks[6], (3, 32), 32)
    P["lin1_b"] = _uniform(ks[7], (3,), 32)
    P["b_lin1_w"] = _uniform(ks[8], (32, 3), 3)
    P["b_lin1_b"] = _uniform(ks[9], (32,), 3)
    # ConvTranspose2d weights: (Cin, Cout, k, k)
    P["b_cov1_w"] = _uniform(ks[10], (16, 1, 3, 3), 1 * 9)
    P["b_cov1_b"] = _uniform(ks[11], (1,), 1 * 9)
    P["b_cov2_w"] = _uniform(ks[12], (5, 16, 3, 3), 16 * 9)
    P["b_cov2_b"] = _uniform(ks[13], (16,), 16 * 9)
    P["b_cov3_w"] = _uniform(ks[14], (2, 5, 3, 3), 5 * 9)
    P["b_cov3_b"] = _uniform(ks[15], (5,), 5 * 9)
    return P


if __name__ == "__main__":
    key = jax.random.PRNGKey(0)
    k_x, k_p = jax.random.split(key)

    # Input implied by the module's view(-1, 32) / view(-1, 2, 4, 4): (N, 1, 8, 8)
    x = jax.random.normal(k_x, (2, 1, 8, 8), jnp.float32)
    params = init_params(k_p)

    ref = jax.block_until_ready(reference_forward(x, params))
    fwd = jax.jit(autoencoder_forward)

    # f32 dot operands: bit-faithful to the module's numerics.
    packed_f32 = prepare_params(params)                    # one-time, off hot path
    out = jax.block_until_ready(fwd(x, packed_f32))
    assert out.shape == (2, 1, 8, 8), out.shape
    np.testing.assert_allclose(np.asarray(out), np.asarray(ref),
                               rtol=1e-4, atol=1e-4)

    # bf16 dot operands (v6e/v7x MXU fast path; f32 accumulate + elementwise).
    packed_bf16 = prepare_params(params, dtype=jnp.bfloat16)
    out_bf16 = jax.block_until_ready(fwd(x, packed_bf16))
    np.testing.assert_allclose(np.asarray(out_bf16), np.asarray(ref),
                               rtol=1e-1, atol=1e-1)

    print("KERNEL_OK")
</pallas_src>

<mosaic_0001>
module attributes {stable_mosaic.version = 11 : i64} {
  func.func @_fused_autoencoder_kernel(%arg0: i32, %arg1: memref<8x64xf32, #tpu.memory_space<vmem>>, %arg2: memref<64x256xf32, #tpu.memory_space<vmem>>, %arg3: memref<1x256xf32, #tpu.memory_space<vmem>>, %arg4: memref<256x128xf32, #tpu.memory_space<vmem>>, %arg5: memref<1x128xf32, #tpu.memory_space<vmem>>, %arg6: memref<128x1024xf32, #tpu.memory_space<vmem>>, %arg7: memref<1x1024xf32, #tpu.memory_space<vmem>>, %arg8: memref<1024x64xf32, #tpu.memory_space<vmem>>, %arg9: memref<1x64xf32, #tpu.memory_space<vmem>>, %arg10: memref<8x64xf32, #tpu.memory_space<vmem>>) attributes {dimension_semantics = [#tpu.dimension_semantics<parallel>], iteration_bounds = array<i64: 1>, scalar_prefetch = 0 : i64, scratch_operands = 0 : i64, tpu.core_type = #tpu.core_type<tc>, window_params = [{transform_indices = @transform_0, window_bounds = array<i64: 8, 64>}, {pipeline_mode = #tpu.pipeline_mode<synchronous>, transform_indices = @transform_1, window_bounds = array<i64: 64, 256>}, {pipeline_mode = #tpu.pipeline_mode<synchronous>, transform_indices = @transform_2, window_bounds = array<i64: 1, 256>}, {pipeline_mode = #tpu.pipeline_mode<synchronous>, transform_indices = @transform_3, window_bounds = array<i64: 256, 128>}, {pipeline_mode = #tpu.pipeline_mode<synchronous>, transform_indices = @transform_4, window_bounds = array<i64: 1, 128>}, {pipeline_mode = #tpu.pipeline_mode<synchronous>, transform_indices = @transform_5, window_bounds = array<i64: 128, 1024>}, {pipeline_mode = #tpu.pipeline_mode<synchronous>, transform_indices = @transform_6, window_bounds = array<i64: 1, 1024>}, {pipeline_mode = #tpu.pipeline_mode<synchronous>, transform_indices = @transform_7, window_bounds = array<i64: 1024, 64>}, {pipeline_mode = #tpu.pipeline_mode<synchronous>, transform_indices = @transform_8, window_bounds = array<i64: 1, 64>}, {transform_indices = @transform_9, window_bounds = array<i64: 8, 64>}]} {
    %c0 = arith.constant 0 : index
    %c0_0 = arith.constant 0 : index
    %0 = vector.load %arg1[%c0, %c0_0] : memref<8x64xf32, #tpu.memory_space<vmem>>, vector<8x64xf32>
    %c0_1 = arith.constant 0 : index
    %c0_2 = arith.constant 0 : index
    %1 = vector.load %arg2[%c0_1, %c0_2] : memref<64x256xf32, #tpu.memory_space<vmem>>, vector<64x256xf32>
    %cst = arith.constant dense<0.000000e+00> : vector<8x256xf32>
    %2 = tpu.matmul %0, %1, %cst {dimension_numbers = #tpu.dot_dimension_numbers<[1], [0], [0], [1], [0, 0, 1, 1], [], []>} : vector<8x64xf32>, vector<64x256xf32>, vector<8x256xf32> -> vector<8x256xf32>
    %c0_3 = arith.constant 0 : index
    %c0_4 = arith.constant 0 : index
    %3 = vector.load %arg3[%c0_3, %c0_4] : memref<1x256xf32, #tpu.memory_space<vmem>>, vector<1x256xf32>
    %4 = vector.broadcast %3 : vector<1x256xf32> to vector<8x256xf32>
    %5 = arith.addf %2, %4 : vector<8x256xf32>
    %cst_5 = arith.constant 0.000000e+00 : f32
    %6 = vector.broadcast %cst_5 : f32 to vector<8x256xf32>
    %7 = arith.maximumf %5, %6 : vector<8x256xf32>
    %c0_6 = arith.constant 0 : index
    %c0_7 = arith.constant 0 : index
    %8 = vector.load %arg4[%c0_6, %c0_7] : memref<256x128xf32, #tpu.memory_space<vmem>>, vector<256x128xf32>
    %cst_8 = arith.constant dense<0.000000e+00> : vector<8x128xf32>
    %9 = tpu.matmul %7, %8, %cst_8 {dimension_numbers = #tpu.dot_dimension_numbers<[1], [0], [0], [1], [0, 0, 1, 1], [], []>} : vector<8x256xf32>, vector<256x128xf32>, vector<8x128xf32> -> vector<8x128xf32>
    %c0_9 = arith.constant 0 : index
    %c0_10 = arith.constant 0 : index
    %10 = vector.load %arg5[%c0_9, %c0_10] : memref<1x128xf32, #tpu.memory_space<vmem>>, vector<1x128xf32>
    %11 = vector.broadcast %10 : vector<1x128xf32> to vector<8x128xf32>
    %12 = arith.addf %9, %11 : vector<8x128xf32>
    %cst_11 = arith.constant 0.000000e+00 : f32
    %13 = vector.broadcast %cst_11 : f32 to vector<8x128xf32>
    %14 = arith.maximumf %12, %13 : vector<8x128xf32>
    %c0_12 = arith.constant 0 : index
    %c0_13 = arith.constant 0 : index
    %15 = vector.load %arg6[%c0_12, %c0_13] : memref<128x1024xf32, #tpu.memory_space<vmem>>, vector<128x1024xf32>
    %cst_14 = arith.constant dense<0.000000e+00> : vector<8x1024xf32>
    %16 = tpu.matmul %14, %15, %cst_14 {dimension_numbers = #tpu.dot_dimension_numbers<[1], [0], [0], [1], [0, 0, 1, 1], [], []>} : vector<8x128xf32>, vector<128x1024xf32>, vector<8x1024xf32> -> vector<8x1024xf32>
    %c0_15 = arith.constant 0 : index
    %c0_16 = arith.constant 0 : index
    %17 = vector.load %arg7[%c0_15, %c0_16] : memref<1x1024xf32, #tpu.memory_space<vmem>>, vector<1x1024xf32>
    %18 = vector.broadcast %17 : vector<1x1024xf32> to vector<8x1024xf32>
    %19 = arith.addf %16, %18 : vector<8x1024xf32>
    %cst_17 = arith.constant 0.000000e+00 : f32
    %20 = vector.broadcast %cst_17 : f32 to vector<8x1024xf32>
    %21 = arith.maximumf %19, %20 : vector<8x1024xf32>
    %c0_18 = arith.constant 0 : index
    %c0_19 = arith.constant 0 : index
    %22 = vector.load %arg8[%c0_18, %c0_19] : memref<1024x64xf32, #tpu.memory_space<vmem>>, vector<1024x64xf32>
    %cst_20 = arith.constant dense<0.000000e+00> : vector<8x64xf32>
    %23 = tpu.matmul %21, %22, %cst_20 {dimension_numbers = #tpu.dot_dimension_numbers<[1], [0], [0], [1], [0, 0, 1, 1], [], []>} : vector<8x1024xf32>, vector<1024x64xf32>, vector<8x64xf32> -> vector<8x64xf32>
    %c0_21 = arith.constant 0 : index
    %c0_22 = arith.constant 0 : index
    %24 = vector.load %arg9[%c0_21, %c0_22] : memref<1x64xf32, #tpu.memory_space<vmem>>, vector<1x64xf32>
    %25 = vector.broadcast %24 : vector<1x64xf32> to vector<8x64xf32>
    %26 = arith.addf %23, %25 : vector<8x64xf32>
    %27 = math.tanh %26 : vector<8x64xf32>
    %c0_23 = arith.constant 0 : index
    %c0_24 = arith.constant 0 : index
    %28 = vector.load %arg10[%c0_23, %c0_24] : memref<8x64xf32, #tpu.memory_space<vmem>>, vector<8x64xf32>
    tpu.vector_store %arg10[%c0_23, %c0_24], %27 {strides = array<i32>} : memref<8x64xf32, #tpu.memory_space<vmem>>, vector<8x64xf32>,
    return
  }
  func.func @transform_0(%arg0: i32) -> (i32, i32) {
    %c0_i32 = arith.constant 0 : i32
    %c0_i32_0 = arith.constant 0 : i32
    return %arg0, %c0_i32 : i32, i32
  }
  func.func @transform_1(%arg0: i32) -> (i32, i32) {
    %c0_i32 = arith.constant 0 : i32
    %c0_i32_0 = arith.constant 0 : i32
    %c0_i32_1 = arith.constant 0 : i32
    return %c0_i32, %c0_i32_0 : i32, i32
  }
  func.func @transform_2(%arg0: i32) -> (i32, i32) {
    %c0_i32 = arith.constant 0 : i32
    %c0_i32_0 = arith.constant 0 : i32
    %c0_i32_1 = arith.constant 0 : i32
    return %c0_i32, %c0_i32_0 : i32, i32
  }
  func.func @transform_3(%arg0: i32) -> (i32, i32) {
    %c0_i32 = arith.constant 0 : i32
    %c0_i32_0 = arith.constant 0 : i32
    %c0_i32_1 = arith.constant 0 : i32
    return %c0_i32, %c0_i32_0 : i32, i32
  }
  func.func @transform_4(%arg0: i32) -> (i32, i32) {
    %c0_i32 = arith.constant 0 : i32
    %c0_i32_0 = arith.constant 0 : i32
    %c0_i32_1 = arith.constant 0 : i32
    return %c0_i32, %c0_i32_0 : i32, i32
  }
  func.func @transform_5(%arg0: i32) -> (i32, i32) {
    %c0_i32 = arith.constant 0 : i32
    %c0_i32_0 = arith.constant 0 : i32
    %c0_i32_1 = arith.constant 0 : i32
    return %c0_i32, %c0_i32_0 : i32, i32
  }
  func.func @transform_6(%arg0: i32) -> (i32, i32) {
    %c0_i32 = arith.constant 0 : i32
    %c0_i32_0 = arith.constant 0 : i32
    %c0_i32_1 = arith.constant 0 : i32
    return %c0_i32, %c0_i32_0 : i32, i32
  }
  func.func @transform_7(%arg0: i32) -> (i32, i32) {
    %c0_i32 = arith.constant 0 : i32
    %c0_i32_0 = arith.constant 0 : i32
    %c0_i32_1 = arith.constant 0 : i32
    return %c0_i32, %c0_i32_0 : i32, i32
  }
  func.func @transform_8(%arg0: i32) -> (i32, i32) {
    %c0_i32 = arith.constant 0 : i32
    %c0_i32_0 = arith.constant 0 : i32
    %c0_i32_1 = arith.constant 0 : i32
    return %c0_i32, %c0_i32_0 : i32, i32
  }
  func.func @transform_9(%arg0: i32) -> (i32, i32) {
    %c0_i32 = arith.constant 0 : i32
    %c0_i32_0 = arith.constant 0 : i32
    return %arg0, %c0_i32 : i32, i32
  }
}

</mosaic_0001>

<llo_original>
// kernel: autoencoder_forward.1
$region0: #{autoencoder_forward.1}
  #allocation0 [shape = 'u32[]', space=smem, size = 0x4, offset = 0x4, fixed_abs, tag = 'smem constant byte address 0x4 - core index']
  #allocation1 [shape = 'u32[72,128]{1,0:T(1,128)}', space=vmem, size = 0x9000, scoped, tag = 'internal scratch']
  %s0 = inlined_call_operand.vmem [shape: f32[8,64], index: 0, kind: input, shape index: {}]
  %s1 = inlined_call_operand.vmem [shape: f32[64,256], index: 1, kind: input, shape index: {}]
  %s2 = inlined_call_operand.vmem [shape: f32[1,256], index: 2, kind: input, shape index: {}]
  %s3 = inlined_call_operand.vmem [shape: f32[256,128], index: 3, kind: input, shape index: {}]
  %s4 = inlined_call_operand.vmem [shape: f32[1,128], index: 4, kind: input, shape index: {}]
  %s5 = inlined_call_operand.vmem [shape: f32[128,1024], index: 5, kind: input, shape index: {}]
  %s6 = inlined_call_operand.vmem [shape: f32[1,1024], index: 6, kind: input, shape index: {}]
  %s7 = inlined_call_operand.vmem [shape: f32[1024,64], index: 7, kind: input, shape index: {}]
  %s8 = inlined_call_operand.vmem [shape: f32[1,64], index: 8, kind: input, shape index: {}]
  %s9 = inlined_call_operand.vmem [shape: f32[8,64], index: 9, kind: output, shape index: {}]
  %s10 = sld [smem:[#allocation0]]
  $region46: #{autoencoder_forward.1} parent=0
    _
  %s12 = ssub.s32 1, %s10
  %s13 = scalar_select 0, %s12, %s10
  // Predicated region
  $region2: #{autoencoder_forward.1} parent=0 // pred_check
    _
  $region3: #{autoencoder_forward.1} parent=0 // pred_check_branch
    %15 = sbr.rel (0) target = $region5
  $region4: #{autoencoder_forward.1} parent=0 // pred_region
    _
  $region5: #{autoencoder_forward.1} parent=0 // pred_fallthru
    _
  // Predicated region
  $region6: #{autoencoder_forward.1} parent=0 // pred_check
    _
  $region7: #{autoencoder_forward.1} parent=0 // pred_check_branch
    %17 = sbr.rel (0) target = $region9
  $region8: #{autoencoder_forward.1} parent=0 // pred_region
    _
  $region9: #{autoencoder_forward.1} parent=0 // pred_fallthru
    _
  // Predicated region
  $region10: #{autoencoder_forward.1} parent=0 // pred_check
    _
  $region11: #{autoencoder_forward.1} parent=0 // pred_check_branch
    %19 = sbr.rel (0) target = $region13
  $region12: #{autoencoder_forward.1} parent=0 // pred_region
    _
  $region13: #{autoencoder_forward.1} parent=0 // pred_fallthru
    _
  // Predicated region
  $region14: #{autoencoder_forward.1} parent=0 // pred_check
    _
  $region15: #{autoencoder_forward.1} parent=0 // pred_check_branch
    %21 = sbr.rel (0) target = $region17
  $region16: #{autoencoder_forward.1} parent=0 // pred_region
    _
  $region17: #{autoencoder_forward.1} parent=0 // pred_fallthru
    _
  // Predicated region
  $region18: #{autoencoder_forward.1} parent=0 // pred_check
    _
  $region19: #{autoencoder_forward.1} parent=0 // pred_check_branch
    %23 = sbr.rel (0) target = $region21
  $region20: #{autoencoder_forward.1} parent=0 // pred_region
    _
  $region21: #{autoencoder_forward.1} parent=0 // pred_fallthru
    _
  // Predicated region
  $region22: #{autoencoder_forward.1} parent=0 // pred_check
    _
  $region23: #{autoencoder_forward.1} parent=0 // pred_check_branch
    %25 = sbr.rel (0) target = $region25
  $region24: #{autoencoder_forward.1} parent=0 // pred_region
    _
  $region25: #{autoencoder_forward.1} parent=0 // pred_fallthru
    _
  // Predicated region
  $region26: #{autoencoder_forward.1} parent=0 // pred_check
    _
  $region27: #{autoencoder_forward.1} parent=0 // pred_check_branch
    %27 = sbr.rel (0) target = $region29
  $region28: #{autoencoder_forward.1} parent=0 // pred_region
    _
  $region29: #{autoencoder_forward.1} parent=0 // pred_fallthru
    _
  // Predicated region
  $region30: #{autoencoder_forward.1} parent=0 // pred_check
    _
  $region31: #{autoencoder_forward.1} parent=0 // pred_check_branch
    %29 = sbr.rel (0) target = $region33
  $region32: #{autoencoder_forward.1} parent=0 // pred_region
    _
  $region33: #{autoencoder_forward.1} parent=0 // pred_fallthru
    _
  // Predicated region
  $region34: #{autoencoder_forward.1} parent=0 // pred_check
    _
  $region35: #{autoencoder_forward.1} parent=0 // pred_check_branch
    %31 = sbr.rel (0) target = $region37
  $region36: #{autoencoder_forward.1} parent=0 // pred_region
    _
  $region37: #{autoencoder_forward.1} parent=0 // pred_fallthru
    _
  %v32 = vld [vmem:[%s0] sm:$0xff]
  %v33 = vld [vmem:[%s1] sm:$0xff]
  %v34 = vld [vmem:[%s1 + $0x8] sm:$0xff]
  %v35 = vld [vmem:[%s1 + $0x10] sm:$0xff]
  %v36 = vld [vmem:[%s1 + $0x18] sm:$0xff]
  %v37 = vld [vmem:[%s1 + $0x20] sm:$0xff]
  %v38 = vld [vmem:[%s1 + $0x28] sm:$0xff]
  %v39 = vld [vmem:[%s1 + $0x30] sm:$0xff]
  %v40 = vld [vmem:[%s1 + $0x38] sm:$0xff]
  %v41 = vld [vmem:[%s1 + $0x40] sm:$0xff]
  %v42 = vld [vmem:[%s1 + $0x48] sm:$0xff]
  %v43 = vld [vmem:[%s1 + $0x50] sm:$0xff]
  %v44 = vld [vmem:[%s1 + $0x58] sm:$0xff]
  %v45 = vld [vmem:[%s1 + $0x60] sm:$0xff]
  %v46 = vld [vmem:[%s1 + $0x68] sm:$0xff]
  %v47 = vld [vmem:[%s1 + $0x70] sm:$0xff]
  %v48 = vld [vmem:[%s1 + $0x78] sm:$0xff]
  %v49 = vld [vmem:[%s2] sm:$0x3]
  %v51 = vperm.slane %v49, 0
  %v52 = vperm.slane %v49, 1
  %vm55 = vcmask 523264
  %v57 = vsel %vm55, %v32, 0
  %59 = vmatpush.msra.mxu0 0.0
  %60 = vmatpush.msra.mxu0 0.0
  %61 = vmatpush.msra.mxu0 0.0
  %62 = vmatpush.msra.mxu0 0.0
  %63 = vmatpush.msra.mxu0 0.0
  %64 = vmatpush.msra.mxu0 0.0
  %65 = vmatpush.msra.mxu0 0.0
  %66 = vmatpush.msra.mxu0 0.0
  %67 = vmatpush.msra.mxu0 %v47
  %68 = vmatpush.msra.mxu0 %v45
  %69 = vmatpush.msra.mxu0 %v43
  %70 = vmatpush.msra.mxu0 %v41
  %71 = vmatpush.msra.mxu0 %v39
  %72 = vmatpush.msra.mxu0 %v37
  %73 = vmatpush.msra.mxu0 %v35
  %74 = vmatpush.msra.mxu0 %v33
  %75 = vmatmul.f32.gmra.mxu0 %v57
  %v76 = vpop.f32.mrf.mxu0
  %v77 = vadd.f32 %v51, %v76
  %78 = vdwg.mxu0
  %79 = vmatpush.msra.mxu0 0.0
  %80 = vmatpush.msra.mxu0 0.0
  %81 = vmatpush.msra.mxu0 0.0
  %82 = vmatpush.msra.mxu0 0.0
  %83 = vmatpush.msra.mxu0 0.0
  %84 = vmatpush.msra.mxu0 0.0
  %85 = vmatpush.msra.mxu0 0.0
  %86 = vmatpush.msra.mxu0 0.0
  %87 = vmatpush.msra.mxu0 %v48
  %88 = vmatpush.msra.mxu0 %v46
  %89 = vmatpush.msra.mxu0 %v44
  %90 = vmatpush.msra.mxu0 %v42
  %91 = vmatpush.msra.mxu0 %v40
  %92 = vmatpush.msra.mxu0 %v38
  %93 = vmatpush.msra.mxu0 %v36
  %94 = vmatpush.msra.mxu0 %v34
  %95 = vmatmul.f32.gmra.mxu0 %v57
  %v96 = vpop.f32.mrf.mxu0
  %v97 = vadd.f32 %v52, %v96
  %98 = vdwg.mxu0
  %v99 = vmax.f32 %v77, 0.0
  %v100 = vmax.f32 %v97, 0.0
  %v101 = vld [vmem:[%s3] sm:$0xff]
  %v102 = vld [vmem:[%s3 + $0x8] sm:$0xff]
  %v103 = vld [vmem:[%s3 + $0x10] sm:$0xff]
  %v104 = vld [vmem:[%s3 + $0x18] sm:$0xff]
  %v105 = vld [vmem:[%s3 + $0x20] sm:$0xff]
  %v106 = vld [vmem:[%s3 + $0x28] sm:$0xff]
  %v107 = vld [vmem:[%s3 + $0x30] sm:$0xff]
  %v108 = vld [vmem:[%s3 + $0x38] sm:$0xff]
  %v109 = vld [vmem:[%s3 + $0x40] sm:$0xff]
  %v110 = vld [vmem:[%s3 + $0x48] sm:$0xff]
  %v111 = vld [vmem:[%s3 + $0x50] sm:$0xff]
  %v112 = vld [vmem:[%s3 + $0x58] sm:$0xff]
  %v113 = vld [vmem:[%s3 + $0x60] sm:$0xff]
  %v114 = vld [vmem:[%s3 + $0x68] sm:$0xff]
  %v115 = vld [vmem:[%s3 + $0x70] sm:$0xff]
  %v116 = vld [vmem:[%s3 + $0x78] sm:$0xff]
  %v117 = vld [vmem:[%s3 + $0x80] sm:$0xff]
  %v118 = vld [vmem:[%s3 + $0x88] sm:$0xff]
  %v119 = vld [vmem:[%s3 + $0x90] sm:$0xff]
  %v120 = vld [vmem:[%s3 + $0x98] sm:$0xff]
  %v121 = vld [vmem:[%s3 + $0xa0] sm:$0xff]
  %v122 = vld [vmem:[%s3 + $0xa8] sm:$0xff]
  %v123 = vld [vmem:[%s3 + $0xb0] sm:$0xff]
  %v124 = vld [vmem:[%s3 + $0xb8] sm:$0xff]
  %v125 = vld [vmem:[%s3 + $0xc0] sm:$0xff]
  %v126 = vld [vmem:[%s3 + $0xc8] sm:$0xff]
  %v127 = vld [vmem:[%s3 + $0xd0] sm:$0xff]
  %v128 = vld [vmem:[%s3 + $0xd8] sm:$0xff]
  %v129 = vld [vmem:[%s3 + $0xe0] sm:$0xff]
  %v130 = vld [vmem:[%s3 + $0xe8] sm:$0xff]
  %v131 = vld [vmem:[%s3 + $0xf0] sm:$0xff]
  %v132 = vld [vmem:[%s3 + $0xf8] sm:$0xff]
  %v133 = vld [vmem:[%s4] sm:$0x1]
  %v135 = vperm.slane %v133, 0
  %137 = vmatpush.msra.mxu0 %v116
  %138 = vmatpush.msra.mxu0 %v115
  %139 = vmatpush.msra.mxu0 %v114
  %140 = vmatpush.msra.mxu0 %v113
  %141 = vmatpush.msra.mxu0 %v112
  %142 = vmatpush.msra.mxu0 %v111
  %143 = vmatpush.msra.mxu0 %v110
  %144 = vmatpush.msra.mxu0 %v109
  %145 = vmatpush.msra.mxu0 %v108
  %146 = vmatpush.msra.mxu0 %v107
  %147 = vmatpush.msra.mxu0 %v106
  %148 = vmatpush.msra.mxu0 %v105
  %149 = vmatpush.msra.mxu0 %v104
  %150 = vmatpush.msra.mxu0 %v103
  %151 = vmatpush.msra.mxu0 %v102
  %152 = vmatpush.msra.mxu0 %v101
  %153 = vmatmul.f32.gmra.mxu0 %v99
  %v154 = vpop.f32.mrf.mxu0
  %v155 = vadd.f32 %v135, %v154
  %156 = vdwg.mxu0
  %157 = vmatpush.msra.mxu0 %v132
  %158 = vmatpush.msra.mxu0 %v131
  %159 = vmatpush.msra.mxu0 %v130
  %160 = vmatpush.msra.mxu0 %v129
  %161 = vmatpush.msra.mxu0 %v128
  %162 = vmatpush.msra.mxu0 %v127
  %163 = vmatpush.msra.mxu0 %v126
  %164 = vmatpush.msra.mxu0 %v125
  %165 = vmatpush.msra.mxu0 %v124
  %166 = vmatpush.msra.mxu0 %v123
  %167 = vmatpush.msra.mxu0 %v122
  %168 = vmatpush.msra.mxu0 %v121
  %169 = vmatpush.msra.mxu0 %v120
  %170 = vmatpush.msra.mxu0 %v119
  %171 = vmatpush.msra.mxu0 %v118
  %172 = vmatpush.msra.mxu0 %v117
  %173 = vmatmul.f32.gmra.mxu0 %v100
  %v174 = vpop.f32.mrf.mxu0
  %v175 = vadd.f32 %v155, %v174
  %176 = vdwg.mxu0
  %v177 = vmax.f32 %v175, 0.0
  %v178 = vld [vmem:[%s5] sm:$0xff]
  %v179 = vld [vmem:[%s5 + $0x8] sm:$0xff]
  %v180 = vld [vmem:[%s5 + $0x10] sm:$0xff]
  %v181 = vld [vmem:[%s5 + $0x18] sm:$0xff]
  %v182 = vld [vmem:[%s5 + $0x20] sm:$0xff]
  %v183 = vld [vmem:[%s5 + $0x28] sm:$0xff]
  %v184 = vld [vmem:[%s5 + $0x30] sm:$0xff]
  %v185 = vld [vmem:[%s5 + $0x38] sm:$0xff]
  %v186 = vld [vmem:[%s5 + $0x40] sm:$0xff]
  %v187 = vld [vmem:[%s5 + $0x48] sm:$0xff]
  %v188 = vld [vmem:[%s5 + $0x50] sm:$0xff]
  %v189 = vld [vmem:[%s5 + $0x58] sm:$0xff]
  %v190 = vld [vmem:[%s5 + $0x60] sm:$0xff]
  %v191 = vld [vmem:[%s5 + $0x68] sm:$0xff]
  %v192 = vld [vmem:[%s5 + $0x70] sm:$0xff]
  %v193 = vld [vmem:[%s5 + $0x78] sm:$0xff]
  %v194 = vld [vmem:[%s5 + $0x80] sm:$0xff]
  %v195 = vld [vmem:[%s5 + $0x88] sm:$0xff]
  %v196 = vld [vmem:[%s5 + $0x90] sm:$0xff]
  %v197 = vld [vmem:[%s5 + $0x98] sm:$0xff]
  %v198 = vld [vmem:[%s5 + $0xa0] sm:$0xff]
  %v199 = vld [vmem:[%s5 + $0xa8] sm:$0xff]
  %v200 = vld [vmem:[%s5 + $0xb0] sm:$0xff]
  %v201 = vld [vmem:[%s5 + $0xb8] sm:$0xff]
  %v202 = vld [vmem:[%s5 + $0xc0] sm:$0xff]
  %v203 = vld [vmem:[%s5 + $0xc8] sm:$0xff]
  %v204 = vld [vmem:[%s5 + $0xd0] sm:$0xff]
  %v205 = vld [vmem:[%s5 + $0xd8] sm:$0xff]
  %v206 = vld [vmem:[%s5 + $0xe0] sm:$0xff]
  %v207 = vld [vmem:[%s5 + $0xe8] sm:$0xff]
  %v208 = vld [vmem:[%s5 + $0xf0] sm:$0xff]
  %v209 = vld [vmem:[%s5 + $0xf8] sm:$0xff]
  %v210 = vld [vmem:[%s5 + $0x100] sm:$0xff]
  %v211 = vld [vmem:[%s5 + $0x108] sm:$0xff]
  %v212 = vld [vmem:[%s5 + $0x110] sm:$0xff]
  %v213 = vld [vmem:[%s5 + $0x118] sm:$0xff]
  %v214 = vld [vmem:[%s5 + $0x120] sm:$0xff]
  %v215 = vld [vmem:[%s5 + $0x128] sm:$0xff]
  %v216 = vld [vmem:[%s5 + $0x130] sm:$0xff]
  %v217 = vld [vmem:[%s5 + $0x138] sm:$0xff]
  %v218 = vld [vmem:[%s5 + $0x140] sm:$0xff]
  %v219 = vld [vmem:[%s5 + $0x148] sm:$0xff]
  %v220 = vld [vmem:[%s5 + $0x150] sm:$0xff]
  %v221 = vld [vmem:[%s5 + $0x158] sm:$0xff]
  %v222 = vld [vmem:[%s5 + $0x160] sm:$0xff]
  %v223 = vld [vmem:[%s5 + $0x168] sm:$0xff]
  %v224 = vld [vmem:[%s5 + $0x170] sm:$0xff]
  %v225 = vld [vmem:[%s5 + $0x178] sm:$0xff]
  %v226 = vld [vmem:[%s5 + $0x180] sm:$0xff]
  %v227 = vld [vmem:[%s5 + $0x188] sm:$0xff]
  %v228 = vld [vmem:[%s5 + $0x190] sm:$0xff]
  %v229 = vld [vmem:[%s5 + $0x198] sm:$0xff]
  %v230 = vld [vmem:[%s5 + $0x1a0] sm:$0xff]
  %v231 = vld [vmem:[%s5 + $0x1a8] sm:$0xff]
  %v232 = vld [vmem:[%s5 + $0x1b0] sm:$0xff]
  %v233 = vld [vmem:[%s5 + $0x1b8] sm:$0xff]
  %v234 = vld [vmem:[%s5 + $0x1c0] sm:$0xff]
  %v235 = vld [vmem:[%s5 + $0x1c8] sm:$0xff]
  %v236 = vld [vmem:[%s5 + $0x1d0] sm:$0xff]
  %v237 = vld [vmem:[%s5 + $0x1d8] sm:$0xff]
  %v238 = vld [vmem:[%s5 + $0x1e0] sm:$0xff]
  %v239 = vld [vmem:[%s5 + $0x1e8] sm:$0xff]
  %v240 = vld [vmem:[%s5 + $0x1f0] sm:$0xff]
  %v241 = vld [vmem:[%s5 + $0x1f8] sm:$0xff]
  %v242 = vld [vmem:[%s5 + $0x200] sm:$0xff]
  %v243 = vld [vmem:[%s5 + $0x208] sm:$0xff]
  %v244 = vld [vmem:[%s5 + $0x210] sm:$0xff]
  %v245 = vld [vmem:[%s5 + $0x218] sm:$0xff]
  %v246 = vld [vmem:[%s5 + $0x220] sm:$0xff]
  %v247 = vld [vmem:[%s5 + $0x228] sm:$0xff]
  %v248 = vld [vmem:[%s5 + $0x230] sm:$0xff]
  %v249 = vld [vmem:[%s5 + $0x238] sm:$0xff]
  %v250 = vld [vmem:[%s5 + $0x240] sm:$0xff]
  %v251 = vld [vmem:[%s5 + $0x248] sm:$0xff]
  %v252 = vld [vmem:[%s5 + $0x250] sm:$0xff]
  %v253 = vld [vmem:[%s5 + $0x258] sm:$0xff]
  %v254 = vld [vmem:[%s5 + $0x260] sm:$0xff]
  %v255 = vld [vmem:[%s5 + $0x268] sm:$0xff]
  %v256 = vld [vmem:[%s5 + $0x270] sm:$0xff]
  %v257 = vld [vmem:[%s5 + $0x278] sm:$0xff]
  %v258 = vld [vmem:[%s5 + $0x280] sm:$0xff]
  %v259 = vld [vmem:[%s5 + $0x288] sm:$0xff]
  %v260 = vld [vmem:[%s5 + $0x290] sm:$0xff]
  %v261 = vld [vmem:[%s5 + $0x298] sm:$0xff]
  %v262 = vld [vmem:[%s5 + $0x2a0] sm:$0xff]
  %v263 = vld [vmem:[%s5 + $0x2a8] sm:$0xff]
  %v264 = vld [vmem:[%s5 + $0x2b0] sm:$0xff]
  %v265 = vld [vmem:[%s5 + $0x2b8] sm:$0xff]
  %v266 = vld [vmem:[%s5 + $0x2c0] sm:$0xff]
  %v267 = vld [vmem:[%s5 + $0x2c8] sm:$0xff]
  %v268 = vld [vmem:[%s5 + $0x2d0] sm:$0xff]
  %v269 = vld [vmem:[%s5 + $0x2d8] sm:$0xff]
  %v270 = vld [vmem:[%s5 + $0x2e0] sm:$0xff]
  %v271 = vld [vmem:[%s5 + $0x2e8] sm:$0xff]
  %v272 = vld [vmem:[%s5 + $0x2f0] sm:$0xff]
  %v273 = vld [vmem:[%s5 + $0x2f8] sm:$0xff]
  %v274 = vld [vmem:[%s5 + $0x300] sm:$0xff]
  %v275 = vld [vmem:[%s5 + $0x308] sm:$0xff]
  %v276 = vld [vmem:[%s5 + $0x310] sm:$0xff]
  %v277 = vld [vmem:[%s5 + $0x318] sm:$0xff]
  %v278 = vld [vmem:[%s5 + $0x320] sm:$0xff]
  %v279 = vld [vmem:[%s5 + $0x328] sm:$0xff]
  %v280 = vld [vmem:[%s5 + $0x330] sm:$0xff]
  %v281 = vld [vmem:[%s5 + $0x338] sm:$0xff]
  %v282 = vld [vmem:[%s5 + $0x340] sm:$0xff]
  %v283 = vld [vmem:[%s5 + $0x348] sm:$0xff]
  %v284 = vld [vmem:[%s5 + $0x350] sm:$0xff]
  %v285 = vld [vmem:[%s5 + $0x358] sm:$0xff]
  %v286 = vld [vmem:[%s5 + $0x360] sm:$0xff]
  %v287 = vld [vmem:[%s5 + $0x368] sm:$0xff]
  %v288 = vld [vmem:[%s5 + $0x370] sm:$0xff]
  %v289 = vld [vmem:[%s5 + $0x378] sm:$0xff]
  %v290 = vld [vmem:[%s5 + $0x380] sm:$0xff]
  %v291 = vld [vmem:[%s5 + $0x388] sm:$0xff]
  %v292 = vld [vmem:[%s5 + $0x390] sm:$0xff]
  %v293 = vld [vmem:[%s5 + $0x398] sm:$0xff]
  %v294 = vld [vmem:[%s5 + $0x3a0] sm:$0xff]
  %v295 = vld [vmem:[%s5 + $0x3a8] sm:$0xff]
  %v296 = vld [vmem:[%s5 + $0x3b0] sm:$0xff]
  %v297 = vld [vmem:[%s5 + $0x3b8] sm:$0xff]
  %v298 = vld [vmem:[%s5 + $0x3c0] sm:$0xff]
  %v299 = vld [vmem:[%s5 + $0x3c8] sm:$0xff]
  %v300 = vld [vmem:[%s5 + $0x3d0] sm:$0xff]
  %v301 = vld [vmem:[%s5 + $0x3d8] sm:$0xff]
  %v302 = vld [vmem:[%s5 + $0x3e0] sm:$0xff]
  %v303 = vld [vmem:[%s5 + $0x3e8] sm:$0xff]
  %v304 = vld [vmem:[%s5 + $0x3f0] sm:$0xff]
  %v305 = vld [vmem:[%s5 + $0x3f8] sm:$0xff]
  %v306 = vld [vmem:[%s6] sm:$0xff]
  %v308 = vperm.slane %v306, 0
  %v309 = vperm.slane %v306, 1
  %v310 = vperm.slane %v306, 2
  %v311 = vperm.slane %v306, 3
  %v312 = vperm.slane %v306, 4
  %v313 = vperm.slane %v306, 5
  %v314 = vperm.slane %v306, 6
  %v315 = vperm.slane %v306, 7
  %324 = vmatpush.msra.mxu0 %v298
  %325 = vmatpush.msra.mxu0 %v290
  %326 = vmatpush.msra.mxu0 %v282
  %327 = vmatpush.msra.mxu0 %v274
  %328 = vmatpush.msra.mxu0 %v266
  %329 = vmatpush.msra.mxu0 %v258
  %330 = vmatpush.msra.mxu0 %v250
  %331 = vmatpush.msra.mxu0 %v242
  %332 = vmatpush.msra.mxu0 %v234
  %333 = vmatpush.msra.mxu0 %v226
  %334 = vmatpush.msra.mxu0 %v218
  %335 = vmatpush.msra.mxu0 %v210
  %336 = vmatpush.msra.mxu0 %v202
  %337 = vmatpush.msra.mxu0 %v194
  %338 = vmatpush.msra.mxu0 %v186
  %339 = vmatpush.msra.mxu0 %v178
  %340 = vmatmul.f32.gmra.mxu0 %v177
  %v341 = vpop.f32.mrf.mxu0
  %v342 = vadd.f32 %v308, %v341
  %343 = vdwg.mxu0
  %344 = vmatpush.msra.mxu0 %v299
  %345 = vmatpush.msra.mxu0 %v291
  %346 = vmatpush.msra.mxu0 %v283
  %347 = vmatpush.msra.mxu0 %v275
  %348 = vmatpush.msra.mxu0 %v267
  %349 = vmatpush.msra.mxu0 %v259
  %350 = vmatpush.msra.mxu0 %v251
  %351 = vmatpush.msra.mxu0 %v243
  %352 = vmatpush.msra.mxu0 %v235
  %353 = vmatpush.msra.mxu0 %v227
  %354 = vmatpush.msra.mxu0 %v219
  %355 = vmatpush.msra.mxu0 %v211
  %356 = vmatpush.msra.mxu0 %v203
  %357 = vmatpush.msra.mxu0 %v195
  %358 = vmatpush.msra.mxu0 %v187
  %359 = vmatpush.msra.mxu0 %v179
  %360 = vmatmul.f32.gmra.mxu0 %v177
  %v361 = vpop.f32.mrf.mxu0
  %v362 = vadd.f32 %v309, %v361
  %363 = vdwg.mxu0
  %364 = vmatpush.msra.mxu0 %v300
  %365 = vmatpush.msra.mxu0 %v292
  %366 = vmatpush.msra.mxu0 %v284
  %367 = vmatpush.msra.mxu0 %v276
  %368 = vmatpush.msra.mxu0 %v268
  %369 = vmatpush.msra.mxu0 %v260
  %370 = vmatpush.msra.mxu0 %v252
  %371 = vmatpush.msra.mxu0 %v244
  %372 = vmatpush.msra.mxu0 %v236
  %373 = vmatpush.msra.mxu0 %v228
  %374 = vmatpush.msra.mxu0 %v220
  %375 = vmatpush.msra.mxu0 %v212
  %376 = vmatpush.msra.mxu0 %v204
  %377 = vmatpush.msra.mxu0 %v196
  %378 = vmatpush.msra.mxu0 %v188
  %379 = vmatpush.msra.mxu0 %v180
  %380 = vmatmul.f32.gmra.mxu0 %v177
  %v381 = vpop.f32.mrf.mxu0
  %v382 = vadd.f32 %v310, %v381
  %383 = vdwg.mxu0
  %384 = vmatpush.msra.mxu0 %v301
  %385 = vmatpush.msra.mxu0 %v293
  %386 = vmatpush.msra.mxu0 %v285
  %387 = vmatpush.msra.mxu0 %v277
  %388 = vmatpush.msra.mxu0 %v269
  %389 = vmatpush.msra.mxu0 %v261
  %390 = vmatpush.msra.mxu0 %v253
  %391 = vmatpush.msra.mxu0 %v245
  %392 = vmatpush.msra.mxu0 %v237
  %393 = vmatpush.msra.mxu0 %v229
  %394 = vmatpush.msra.mxu0 %v221
  %395 = vmatpush.msra.mxu0 %v213
  %396 = vmatpush.msra.mxu0 %v205
  %397 = vmatpush.msra.mxu0 %v197
  %398 = vmatpush.msra.mxu0 %v189
  %399 = vmatpush.msra.mxu0 %v181
  %400 = vmatmul.f32.gmra.mxu0 %v177
  %v401 = vpop.f32.mrf.mxu0
  %v402 = vadd.f32 %v311, %v401
  %403 = vdwg.mxu0
  %404 = vmatpush.msra.mxu0 %v302
  %405 = vmatpush.msra.mxu0 %v294
  %406 = vmatpush.msra.mxu0 %v286
  %407 = vmatpush.msra.mxu0 %v278
  %408 = vmatpush.msra.mxu0 %v270
  %409 = vmatpush.msra.mxu0 %v262
  %410 = vmatpush.msra.mxu0 %v254
  %411 = vmatpush.msra.mxu0 %v246
  %412 = vmatpush.msra.mxu0 %v238
  %413 = vmatpush.msra.mxu0 %v230
  %414 = vmatpush.msra.mxu0 %v222
  %415 = vmatpush.msra.mxu0 %v214
  %416 = vmatpush.msra.mxu0 %v206
  %417 = vmatpush.msra.mxu0 %v198
  %418 = vmatpush.msra.mxu0 %v190
  %419 = vmatpush.msra.mxu0 %v182
  %420 = vmatmul.f32.gmra.mxu0 %v177
  %v421 = vpop.f32.mrf.mxu0
  %v422 = vadd.f32 %v312, %v421
  %423 = vdwg.mxu0
  %424 = vmatpush.msra.mxu0 %v303
  %425 = vmatpush.msra.mxu0 %v295
  %426 = vmatpush.msra.mxu0 %v287
  %427 = vmatpush.msra.mxu0 %v279
  %428 = vmatpush.msra.mxu0 %v271
  %429 = vmatpush.msra.mxu0 %v263
  %430 = vmatpush.msra.mxu0 %v255
  %431 = vmatpush.msra.mxu0 %v247
  %432 = vmatpush.msra.mxu0 %v239
  %433 = vmatpush.msra.mxu0 %v231
  %434 = vmatpush.msra.mxu0 %v223
  %435 = vmatpush.msra.mxu0 %v215
  %436 = vmatpush.msra.mxu0 %v207
  %437 = vmatpush.msra.mxu0 %v199
  %438 = vmatpush.msra.mxu0 %v191
  %439 = vmatpush.msra.mxu0 %v183
  %440 = vmatmul.f32.gmra.mxu0 %v177
  %v441 = vpop.f32.mrf.mxu0
  %v442 = vadd.f32 %v313, %v441
  %443 = vdwg.mxu0
  %444 = vmatpush.msra.mxu0 %v304
  %445 = vmatpush.msra.mxu0 %v296
  %446 = vmatpush.msra.mxu0 %v288
  %447 = vmatpush.msra.mxu0 %v280
  %448 = vmatpush.msra.mxu0 %v272
  %449 = vmatpush.msra.mxu0 %v264
  %450 = vmatpush.msra.mxu0 %v256
  %451 = vmatpush.msra.mxu0 %v248
  %452 = vmatpush.msra.mxu0 %v240
  %453 = vmatpush.msra.mxu0 %v232
  %454 = vmatpush.msra.mxu0 %v224
  %455 = vmatpush.msra.mxu0 %v216
  %456 = vmatpush.msra.mxu0 %v208
  %457 = vmatpush.msra.mxu0 %v200
  %458 = vmatpush.msra.mxu0 %v192
  %459 = vmatpush.msra.mxu0 %v184
  %460 = vmatmul.f32.gmra.mxu0 %v177
  %v461 = vpop.f32.mrf.mxu0
  %v462 = vadd.f32 %v314, %v461
  %463 = vdwg.mxu0
  %464 = vmatpush.msra.mxu0 %v305
  %465 = vmatpush.msra.mxu0 %v297
  %466 = vmatpush.msra.mxu0 %v289
  %467 = vmatpush.msra.mxu0 %v281
  %468 = vmatpush.msra.mxu0 %v273
  %469 = vmatpush.msra.mxu0 %v265
  %470 = vmatpush.msra.mxu0 %v257
  %471 = vmatpush.msra.mxu0 %v249
  %472 = vmatpush.msra.mxu0 %v241
  %473 = vmatpush.msra.mxu0 %v233
  %474 = vmatpush.msra.mxu0 %v225
  %475 = vmatpush.msra.mxu0 %v217
  %476 = vmatpush.msra.mxu0 %v209
  %477 = vmatpush.msra.mxu0 %v201
  %478 = vmatpush.msra.mxu0 %v193
  %479 = vmatpush.msra.mxu0 %v185
  %480 = vmatmul.f32.gmra.mxu0 %v177
  %v481 = vpop.f32.mrf.mxu0
  %v482 = vadd.f32 %v315, %v481
  %483 = vdwg.mxu0
  %v484 = vmax.f32 %v342, 0.0
  %v485 = vmax.f32 %v362, 0.0
  %v486 = vmax.f32 %v382, 0.0
  %v487 = vmax.f32 %v402, 0.0
  %v488 = vmax.f32 %v422, 0.0
  %v489 = vmax.f32 %v442, 0.0
  %v490 = vmax.f32 %v462, 0.0
  %v491 = vmax.f32 %v482, 0.0
  %v492 = vld [vmem:[%s7] sm:$0xff]
  %v493 = vld [vmem:[%s7 + $0x8] sm:$0xff]
  %v494 = vld [vmem:[%s7 + $0x10] sm:$0xff]
  %v495 = vld [vmem:[%s7 + $0x18] sm:$0xff]
  %v496 = vld [vmem:[%s7 + $0x20] sm:$0xff]
  %v497 = vld [vmem:[%s7 + $0x28] sm:$0xff]
  %v498 = vld [vmem:[%s7 + $0x30] sm:$0xff]
  %v499 = vld [vmem:[%s7 + $0x38] sm:$0xff]
  %v500 = vld [vmem:[%s7 + $0x40] sm:$0xff]
  %v501 = vld [vmem:[%s7 + $0x48] sm:$0xff]
  %v502 = vld [vmem:[%s7 + $0x50] sm:$0xff]
  %v503 = vld [vmem:[%s7 + $0x58] sm:$0xff]
  %v504 = vld [vmem:[%s7 + $0x60] sm:$0xff]
  %v505 = vld [vmem:[%s7 + $0x68] sm:$0xff]
  %v506 = vld [vmem:[%s7 + $0x70] sm:$0xff]
  %v507 = vld [vmem:[%s7 + $0x78] sm:$0xff]
  %v508 = vld [vmem:[%s7 + $0x80] sm:$0xff]
  %v509 = vld [vmem:[%s7 + $0x88] sm:$0xff]
  %v510 = vld [vmem:[%s7 + $0x90] sm:$0xff]
  %v511 = vld [vmem:[%s7 + $0x98] sm:$0xff]
  %v512 = vld [vmem:[%s7 + $0xa0] sm:$0xff]
  %v513 = vld [vmem:[%s7 + $0xa8] sm:$0xff]
  %v514 = vld [vmem:[%s7 + $0xb0] sm:$0xff]
  %v515 = vld [vmem:[%s7 + $0xb8] sm:$0xff]
  %v516 = vld [vmem:[%s7 + $0xc0] sm:$0xff]
  %v517 = vld [vmem:[%s7 + $0xc8] sm:$0xff]
  %v518 = vld [vmem:[%s7 + $0xd0] sm:$0xff]
  %v519 = vld [vmem:[%s7 + $0xd8] sm:$0xff]
  %v520 = vld [vmem:[%s7 + $0xe0] sm:$0xff]
  %v521 = vld [vmem:[%s7 + $0xe8] sm:$0xff]
  %v522 = vld [vmem:[%s7 + $0xf0] sm:$0xff]
  %v523 = vld [vmem:[%s7 + $0xf8] sm:$0xff]
  %v524 = vld [vmem:[%s7 + $0x100] sm:$0xff]
  %v525 = vld [vmem:[%s7 + $0x108] sm:$0xff]
  %v526 = vld [vmem:[%s7 + $0x110] sm:$0xff]
  %v527 = vld [vmem:[%s7 + $0x118] sm:$0xff]
  %v528 = vld [vmem:[%s7 + $0x120] sm:$0xff]
  %v529 = vld [vmem:[%s7 + $0x128] sm:$0xff]
  %v530 = vld [vmem:[%s7 + $0x130] sm:$0xff]
  %v531 = vld [vmem:[%s7 + $0x138] sm:$0xff]
  %v532 = vld [vmem:[%s7 + $0x140] sm:$0xff]
  %v533 = vld [vmem:[%s7 + $0x148] sm:$0xff]
  %v534 = vld [vmem:[%s7 + $0x150] sm:$0xff]
  %v535 = vld [vmem:[%s7 + $0x158] sm:$0xff]
  %v536 = vld [vmem:[%s7 + $0x160] sm:$0xff]
  %v537 = vld [vmem:[%s7 + $0x168] sm:$0xff]
  %v538 = vld [vmem:[%s7 + $0x170] sm:$0xff]
  %v539 = vld [vmem:[%s7 + $0x178] sm:$0xff]
  %v540 = vld [vmem:[%s7 + $0x180] sm:$0xff]
  %v541 = vld [vmem:[%s7 + $0x188] sm:$0xff]
  %v542 = vld [vmem:[%s7 + $0x190] sm:$0xff]
  %v543 = vld [vmem:[%s7 + $0x198] sm:$0xff]
  %v544 = vld [vmem:[%s7 + $0x1a0] sm:$0xff]
  %v545 = vld [vmem:[%s7 + $0x1a8] sm:$0xff]
  %v546 = vld [vmem:[%s7 + $0x1b0] sm:$0xff]
  %v547 = vld [vmem:[%s7 + $0x1b8] sm:$0xff]
  %v548 = vld [vmem:[%s7 + $0x1c0] sm:$0xff]
  %v549 = vld [vmem:[%s7 + $0x1c8] sm:$0xff]
  %v550 = vld [vmem:[%s7 + $0x1d0] sm:$0xff]
  %v551 = vld [vmem:[%s7 + $0x1d8] sm:$0xff]
  %v552 = vld [vmem:[%s7 + $0x1e0] sm:$0xff]
  %v553 = vld [vmem:[%s7 + $0x1e8] sm:$0xff]
  %v554 = vld [vmem:[%s7 + $0x1f0] sm:$0xff]
  %v555 = vld [vmem:[%s7 + $0x1f8] sm:$0xff]
  %v556 = vld [vmem:[%s7 + $0x200] sm:$0xff]
  %v557 = vld [vmem:[%s7 + $0x208] sm:$0xff]
  %v558 = vld [vmem:[%s7 + $0x210] sm:$0xff]
  %v559 = vld [vmem:[%s7 + $0x218] sm:$0xff]
  %v560 = vld [vmem:[%s7 + $0x220] sm:$0xff]
  %v561 = vld [vmem:[%s7 + $0x228] sm:$0xff]
  %v562 = vld [vmem:[%s7 + $0x230] sm:$0xff]
  %v563 = vld [vmem:[%s7 + $0x238] sm:$0xff]
  %v564 = vld [vmem:[%s7 + $0x240] sm:$0xff]
  %v565 = vld [vmem:[%s7 + $0x248] sm:$0xff]
  %v566 = vld [vmem:[%s7 + $0x250] sm:$0xff]
  %v567 = vld [vmem:[%s7 + $0x258] sm:$0xff]
  %v568 = vld [vmem:[%s7 + $0x260] sm:$0xff]
  %v569 = vld [vmem:[%s7 + $0x268] sm:$0xff]
  %v570 = vld [vmem:[%s7 + $0x270] sm:$0xff]
  %v571 = vld [vmem:[%s7 + $0x278] sm:$0xff]
  %v572 = vld [vmem:[%s7 + $0x280] sm:$0xff]
  %v573 = vld [vmem:[%s7 + $0x288] sm:$0xff]
  %v574 = vld [vmem:[%s7 + $0x290] sm:$0xff]
  %v575 = vld [vmem:[%s7 + $0x298] sm:$0xff]
  %v576 = vld [vmem:[%s7 + $0x2a0] sm:$0xff]
  %v577 = vld [vmem:[%s7 + $0x2a8] sm:$0xff]
  %v578 = vld [vmem:[%s7 + $0x2b0] sm:$0xff]
  %v579 = vld [vmem:[%s7 + $0x2b8] sm:$0xff]
  %v580 = vld [vmem:[%s7 + $0x2c0] sm:$0xff]
  %v581 = vld [vmem:[%s7 + $0x2c8] sm:$0xff]
  %v582 = vld [vmem:[%s7 + $0x2d0] sm:$0xff]
  %v583 = vld [vmem:[%s7 + $0x2d8] sm:$0xff]
  %v584 = vld [vmem:[%s7 + $0x2e0] sm:$0xff]
  %v585 = vld [vmem:[%s7 + $0x2e8] sm:$0xff]
  %v586 = vld [vmem:[%s7 + $0x2f0] sm:$0xff]
  %v587 = vld [vmem:[%s7 + $0x2f8] sm:$0xff]
  %v588 = vld [vmem:[%s7 + $0x300] sm:$0xff]
  %v589 = vld [vmem:[%s7 + $0x308] sm:$0xff]
  %v590 = vld [vmem:[%s7 + $0x310] sm:$0xff]
  %v591 = vld [vmem:[%s7 + $0x318] sm:$0xff]
  %v592 = vld [vmem:[%s7 + $0x320] sm:$0xff]
  %v593 = vld [vmem:[%s7 + $0x328] sm:$0xff]
  %v594 = vld [vmem:[%s7 + $0x330] sm:$0xff]
  %v595 = vld [vmem:[%s7 + $0x338] sm:$0xff]
  %v596 = vld [vmem:[%s7 + $0x340] sm:$0xff]
  %v597 = vld [vmem:[%s7 + $0x348] sm:$0xff]
  %v598 = vld [vmem:[%s7 + $0x350] sm:$0xff]
  %v599 = vld [vmem:[%s7 + $0x358] sm:$0xff]
  %v600 = vld [vmem:[%s7 + $0x360] sm:$0xff]
  %v601 = vld [vmem:[%s7 + $0x368] sm:$0xff]
  %v602 = vld [vmem:[%s7 + $0x370] sm:$0xff]
  %v603 = vld [vmem:[%s7 + $0x378] sm:$0xff]
  %v604 = vld [vmem:[%s7 + $0x380] sm:$0xff]
  %v605 = vld [vmem:[%s7 + $0x388] sm:$0xff]
  %v606 = vld [vmem:[%s7 + $0x390] sm:$0xff]
  %v607 = vld [vmem:[%s7 + $0x398] sm:$0xff]
  %v608 = vld [vmem:[%s7 + $0x3a0] sm:$0xff]
  %v609 = vld [vmem:[%s7 + $0x3a8] sm:$0xff]
  %v610 = vld [vmem:[%s7 + $0x3b0] sm:$0xff]
  %v611 = vld [vmem:[%s7 + $0x3b8] sm:$0xff]
  %v612 = vld [vmem:[%s7 + $0x3c0] sm:$0xff]
  %v613 = vld [vmem:[%s7 + $0x3c8] sm:$0xff]
  %v614 = vld [vmem:[%s7 + $0x3d0] sm:$0xff]
  %v615 = vld [vmem:[%s7 + $0x3d8] sm:$0xff]
  %v616 = vld [vmem:[%s7 + $0x3e0] sm:$0xff]
  %v617 = vld [vmem:[%s7 + $0x3e8] sm:$0xff]
  %v618 = vld [vmem:[%s7 + $0x3f0] sm:$0xff]
  %v619 = vld [vmem:[%s7 + $0x3f8] sm:$0xff]
  %v620 = vld [vmem:[%s8] sm:$0x1]
  %v622 = vperm.slane %v620, 0
  %624 = vmatpush.msra.mxu0 %v507
  %625 = vmatpush.msra.mxu0 %v506
  %626 = vmatpush.msra.mxu0 %v505
  %627 = vmatpush.msra.mxu0 %v504
  %628 = vmatpush.msra.mxu0 %v503
  %629 = vmatpush.msra.mxu0 %v502
  %630 = vmatpush.msra.mxu0 %v501
  %631 = vmatpush.msra.mxu0 %v500
  %632 = vmatpush.msra.mxu0 %v499
  %633 = vmatpush.msra.mxu0 %v498
  %634 = vmatpush.msra.mxu0 %v497
  %635 = vmatpush.msra.mxu0 %v496
  %636 = vmatpush.msra.mxu0 %v495
  %637 = vmatpush.msra.mxu0 %v494
  %638 = vmatpush.msra.mxu0 %v493
  %639 = vmatpush.msra.mxu0 %v492
  %640 = vmatmul.f32.gmra.mxu0 %v484
  %v641 = vpop.f32.mrf.mxu0
  %v642 = vadd.f32 %v622, %v641
  %643 = vdwg.mxu0
  %644 = vmatpush.msra.mxu0 %v523
  %645 = vmatpush.msra.mxu0 %v522
  %646 = vmatpush.msra.mxu0 %v521
  %647 = vmatpush.msra.mxu0 %v520
  %648 = vmatpush.msra.mxu0 %v519
  %649 = vmatpush.msra.mxu0 %v518
  %650 = vmatpush.msra.mxu0 %v517
  %651 = vmatpush.msra.mxu0 %v516
  %652 = vmatpush.msra.mxu0 %v515
  %653 = vmatpush.msra.mxu0 %v514
  %654 = vmatpush.msra.mxu0 %v513
  %655 = vmatpush.msra.mxu0 %v512
  %656 = vmatpush.msra.mxu0 %v511
  %657 = vmatpush.msra.mxu0 %v510
  %658 = vmatpush.msra.mxu0 %v509
  %659 = vmatpush.msra.mxu0 %v508
  %660 = vmatmul.f32.gmra.mxu0 %v485
  %v661 = vpop.f32.mrf.mxu0
  %v662 = vadd.f32 %v642, %v661
  %663 = vdwg.mxu0
  %664 = vmatpush.msra.mxu0 %v539
  %665 = vmatpush.msra.mxu0 %v538
  %666 = vmatpush.msra.mxu0 %v537
  %667 = vmatpush.msra.mxu0 %v536
  %668 = vmatpush.msra.mxu0 %v535
  %669 = vmatpush.msra.mxu0 %v534
  %670 = vmatpush.msra.mxu0 %v533
  %671 = vmatpush.msra.mxu0 %v532
  %672 = vmatpush.msra.mxu0 %v531
  %673 = vmatpush.msra.mxu0 %v530
  %674 = vmatpush.msra.mxu0 %v529
  %675 = vmatpush.msra.mxu0 %v528
  %676 = vmatpush.msra.mxu0 %v527
  %677 = vmatpush.msra.mxu0 %v526
  %678 = vmatpush.msra.mxu0 %v525
  %679 = vmatpush.msra.mxu0 %v524
  %680 = vmatmul.f32.gmra.mxu0 %v486
  %v681 = vpop.f32.mrf.mxu0
  %v682 = vadd.f32 %v662, %v681
  %683 = vdwg.mxu0
  %684 = vmatpush.msra.mxu0 %v555
  %685 = vmatpush.msra.mxu0 %v554
  %686 = vmatpush.msra.mxu0 %v553
  %687 = vmatpush.msra.mxu0 %v552
  %688 = vmatpush.msra.mxu0 %v551
  %689 = vmatpush.msra.mxu0 %v550
  %690 = vmatpush.msra.mxu0 %v549
  %691 = vmatpush.msra.mxu0 %v548
  %692 = vmatpush.msra.mxu0 %v547
  %693 = vmatpush.msra.mxu0 %v546
  %694 = vmatpush.msra.mxu0 %v545
  %695 = vmatpush.msra.mxu0 %v544
  %696 = vmatpush.msra.mxu0 %v543
  %697 = vmatpush.msra.mxu0 %v542
  %698 = vmatpush.msra.mxu0 %v541
  %699 = vmatpush.msra.mxu0 %v540
  %700 = vmatmul.f32.gmra.mxu0 %v487
  %v701 = vpop.f32.mrf.mxu0
  %v702 = vadd.f32 %v682, %v701
  %703 = vdwg.mxu0
  %704 = vmatpush.msra.mxu0 %v571
  %705 = vmatpush.msra.mxu0 %v570
  %706 = vmatpush.msra.mxu0 %v569
  %707 = vmatpush.msra.mxu0 %v568
  %708 = vmatpush.msra.mxu0 %v567
  %709 = vmatpush.msra.mxu0 %v566
  %710 = vmatpush.msra.mxu0 %v565
  %711 = vmatpush.msra.mxu0 %v564
  %712 = vmatpush.msra.mxu0 %v563
  %713 = vmatpush.msra.mxu0 %v562
  %714 = vmatpush.msra.mxu0 %v561
  %715 = vmatpush.msra.mxu0 %v560
  %716 = vmatpush.msra.mxu0 %v559
  %717 = vmatpush.msra.mxu0 %v558
  %718 = vmatpush.msra.mxu0 %v557
  %719 = vmatpush.msra.mxu0 %v556
  %720 = vmatmul.f32.gmra.mxu0 %v488
  %v721 = vpop.f32.mrf.mxu0
  %v722 = vadd.f32 %v702, %v721
  %723 = vdwg.mxu0
  %724 = vmatpush.msra.mxu0 %v587
  %725 = vmatpush.msra.mxu0 %v586
  %726 = vmatpush.msra.mxu0 %v585
  %727 = vmatpush.msra.mxu0 %v584
  %728 = vmatpush.msra.mxu0 %v583
  %729 = vmatpush.msra.mxu0 %v582
  %730 = vmatpush.msra.mxu0 %v581
  %731 = vmatpush.msra.mxu0 %v580
  %732 = vmatpush.msra.mxu0 %v579
  %733 = vmatpush.msra.mxu0 %v578
  %734 = vmatpush.msra.mxu0 %v577
  %735 = vmatpush.msra.mxu0 %v576
  %736 = vmatpush.msra.mxu0 %v575
  %737 = vmatpush.msra.mxu0 %v574
  %738 = vmatpush.msra.mxu0 %v573
  %739 = vmatpush.msra.mxu0 %v572
  %740 = vmatmul.f32.gmra.mxu0 %v489
  %v741 = vpop.f32.mrf.mxu0
  %v742 = vadd.f32 %v722, %v741
  %743 = vdwg.mxu0
  %744 = vmatpush.msra.mxu0 %v603
  %745 = vmatpush.msra.mxu0 %v602
  %746 = vmatpush.msra.mxu0 %v601
  %747 = vmatpush.msra.mxu0 %v600
  %748 = vmatpush.msra.mxu0 %v599
  %749 = vmatpush.msra.mxu0 %v598
  %750 = vmatpush.msra.mxu0 %v597
  %751 = vmatpush.msra.mxu0 %v596
  %752 = vmatpush.msra.mxu0 %v595
  %753 = vmatpush.msra.mxu0 %v594
  %754 = vmatpush.msra.mxu0 %v593
  %755 = vmatpush.msra.mxu0 %v592
  %756 = vmatpush.msra.mxu0 %v591
  %757 = vmatpush.msra.mxu0 %v590
  %758 = vmatpush.msra.mxu0 %v589
  %759 = vmatpush.msra.mxu0 %v588
  %760 = vmatmul.f32.gmra.mxu0 %v490
  %v761 = vpop.f32.mrf.mxu0
  %v762 = vadd.f32 %v742, %v761
  %763 = vdwg.mxu0
  %764 = vmatpush.msra.mxu0 %v619
  %765 = vmatpush.msra.mxu0 %v618
  %766 = vmatpush.msra.mxu0 %v617
  %767 = vmatpush.msra.mxu0 %v616
  %768 = vmatpush.msra.mxu0 %v615
  %769 = vmatpush.msra.mxu0 %v614
  %770 = vmatpush.msra.mxu0 %v613
  %771 = vmatpush.msra.mxu0 %v612
  %772 = vmatpush.msra.mxu0 %v611
  %773 = vmatpush.msra.mxu0 %v610
  %774 = vmatpush.msra.mxu0 %v609
  %775 = vmatpush.msra.mxu0 %v608
  %776 = vmatpush.msra.mxu0 %v607
  %777 = vmatpush.msra.mxu0 %v606
  %778 = vmatpush.msra.mxu0 %v605
  %779 = vmatpush.msra.mxu0 %v604
  %780 = vmatmul.f32.gmra.mxu0 %v491
  %v781 = vpop.f32.mrf.mxu0
  %v782 = vadd.f32 %v762, %v781
  %783 = vdwg.mxu0
  %v784 = vtanh.pop %v782
  %785 = vst.msk [vmem:[%s9] sm:$0xff] %vm55, %v784
  // Predicated region
  $region38: #{autoencoder_forward.1} parent=0 // pred_check
    _
  $region39: #{autoencoder_forward.1} parent=0 // pred_check_branch
    %787 = sbr.rel (0) target = $region41
  $region40: #{autoencoder_forward.1} parent=0 // pred_region
    _
  $region41: #{autoencoder_forward.1} parent=0 // pred_fallthru
    _
  // Predicated region
  $region42: #{autoencoder_forward.1} parent=0 // pred_check
    _
  $region43: #{autoencoder_forward.1} parent=0 // pred_check_branch
    %789 = sbr.rel (0) target = $region45
  $region44: #{autoencoder_forward.1} parent=0 // pred_region
    _
  $region45: #{autoencoder_forward.1} parent=0 // pred_fallthru
    _

</llo_original>
